<compile_context>
chip_gen: v5e
topology: v5e:2x2
jax: 0.10.0
libtpu: 0.0.40
codegen_flags: <defaults>
</compile_context>

<pallas_src>
import jax
import jax.numpy as jnp
from jax.experimental import pallas as pl
from jax.experimental.pallas import tpu as pltpu

D_IN, H1, H2 = 784, 128, 32
D_PAD = 896       # 7 * 128 — lane-dense feature dim
H2_PAD = 128      # bottleneck padded to a full 128-lane width


def _round_up(x, m):
    return (x + m - 1) // m * m


def autoencoder_kernel(x_ref,
                       w1_ref, b1_ref,
                       w2_ref, b2_ref,
                       w3_ref, b3_ref,
                       w4_ref, b4_ref,
                       o_ref):
    cdt = w1_ref.dtype                      # bf16 (or f32) matmul operand dtype
    x = x_ref[...]                          # already in cdt from the wrapper

    # encoder  (MXU matmuls accumulate in f32; bias + ReLU in f32)
    h = jnp.dot(x, w1_ref[...], preferred_element_type=jnp.float32) + b1_ref[...]
    h = jnp.maximum(h, 0.0).astype(cdt)
    z = jnp.dot(h, w2_ref[...], preferred_element_type=jnp.float32) + b2_ref[...]
    z = jnp.maximum(z, 0.0).astype(cdt)

    # decoder
    d = jnp.dot(z, w3_ref[...], preferred_element_type=jnp.float32) + b3_ref[...]
    d = jnp.maximum(d, 0.0).astype(cdt)
    y = jnp.dot(d, w4_ref[...], preferred_element_type=jnp.float32) + b4_ref[...]
    o_ref[...] = jnp.maximum(y, 0.0).astype(o_ref.dtype)


def autoencoder_forward(x, params, *, tb=256, use_bf16=True):
    """x: (B, 784) float32.  params: dict of PyTorch-layout weights/biases."""
    B, D = x.shape
    assert D == D_IN
    cdt = jnp.bfloat16 if use_bf16 else jnp.float32

    # Batch tile: as big as requested, clamped to the (8-rounded) batch; the
    # batch itself is zero-padded up to a multiple of the tile.
    tb_eff = min(tb, _round_up(B, 8))
    B_pad = _round_up(B, tb_eff)

    # --- pad + cast data (all zero padding is semantically inert) ---------
    xp = jnp.zeros((B_pad, D_PAD), cdt).at[:B, :D_IN].set(x.astype(cdt))

    # PyTorch (out, in) weights -> (in, out); pad to lane-dense shapes.
    w1 = jnp.zeros((D_PAD, H1), cdt).at[:D_IN, :].set(params["w1"].T.astype(cdt))
    b1 = params["b1"].reshape(1, H1).astype(jnp.float32)

    w2 = jnp.zeros((H1, H2_PAD), cdt).at[:, :H2].set(params["w2"].T.astype(cdt))
    b2 = jnp.zeros((1, H2_PAD), jnp.float32).at[:, :H2].set(
        params["b2"].reshape(1, H2).astype(jnp.float32))

    w3 = jnp.zeros((H2_PAD, H1), cdt).at[:H2, :].set(params["w3"].T.astype(cdt))
    b3 = params["b3"].reshape(1, H1).astype(jnp.float32)

    w4 = jnp.zeros((H1, D_PAD), cdt).at[:, :D_IN].set(params["w4"].T.astype(cdt))
    b4 = jnp.zeros((1, D_PAD), jnp.float32).at[:, :D_IN].set(
        params["b4"].reshape(1, D_IN).astype(jnp.float32))

    full = lambda shape: pl.BlockSpec(shape, lambda i: (0, 0))  # VMEM-resident

    out = pl.pallas_call(
        autoencoder_kernel,
        out_shape=jax.ShapeDtypeStruct((B_pad, D_PAD), jnp.float32),
        grid_spec=pltpu.PrefetchScalarGridSpec(
            num_scalar_prefetch=0,
            grid=(B_pad // tb_eff,),
            in_specs=[
                pl.BlockSpec((tb_eff, D_PAD), lambda i: (i, 0)),   # x batch tile
                full((D_PAD, H1)),  full((1, H1)),                 # layer 1
                full((H1, H2_PAD)), full((1, H2_PAD)),             # layer 2
                full((H2_PAD, H1)), full((1, H1)),                 # layer 3
                full((H1, D_PAD)),  full((1, D_PAD)),              # layer 4
            ],
            out_specs=pl.BlockSpec((tb_eff, D_PAD), lambda i: (i, 0)),
        ),
        compiler_params=pltpu.CompilerParams(
            dimension_semantics=("parallel",),        # megacore-shardable on v7x
            vmem_limit_bytes=32 * 1024 * 1024,        # headroom for big tiles, safe on 64 MiB v7x
        ),
    )(xp, w1, b1, w2, b2, w3, b3, w4, b4)

    # Strip batch + feature padding outside the kernel.
    return out[:B, :D_IN]


def reference_forward(x, params):
    h = jnp.maximum(x @ params["w1"].T + params["b1"], 0.0)
    z = jnp.maximum(h @ params["w2"].T + params["b2"], 0.0)
    d = jnp.maximum(z @ params["w3"].T + params["b3"], 0.0)
    y = jnp.maximum(d @ params["w4"].T + params["b4"], 0.0)
    return y


def init_params(key):
    """Deterministic init; weight shapes match nn.Linear (out_features, in_features)."""
    ks = jax.random.split(key, 8)
    def lin(kw, kb, out_f, in_f):
        bound = 1.0 / jnp.sqrt(in_f)
        w = jax.random.uniform(kw, (out_f, in_f), jnp.float32, -bound, bound)
        b = jax.random.uniform(kb, (out_f,), jnp.float32, -bound, bound)
        return w, b
    w1, b1 = lin(ks[0], ks[1], H1, D_IN)
    w2, b2 = lin(ks[2], ks[3], H2, H1)
    w3, b3 = lin(ks[4], ks[5], H1, H2)
    w4, b4 = lin(ks[6], ks[7], D_IN, H1)
    return {"w1": w1, "b1": b1, "w2": w2, "b2": b2,
            "w3": w3, "b3": b3, "w4": w4, "b4": b4}


if __name__ == "__main__":
    key = jax.random.PRNGKey(0)
    pkey, xkey = jax.random.split(key)
    params = init_params(pkey)

    B = 8
    x = jax.random.normal(xkey, (B, D_IN), jnp.float32)
    ref = reference_forward(x, params)

    # Exact-path check (f32 operands): must match the reference tightly.
    out_f32 = jax.block_until_ready(autoencoder_forward(x, params, use_bf16=False))
    assert out_f32.shape == (B, D_IN)
    assert jnp.allclose(out_f32, ref, atol=1e-4, rtol=1e-4), "f32 mismatch vs reference"

    # Fast path (bf16 matmul operands, f32 accumulate): relaxed tolerance.
    out_bf16 = jax.block_until_ready(autoencoder_forward(x, params, use_bf16=True))
    assert out_bf16.shape == (B, D_IN)
    assert jnp.allclose(out_bf16, ref, atol=5e-2, rtol=5e-2), "bf16 mismatch vs reference"

    print("KERNEL_OK")
</pallas_src>

<mosaic_0001>
module attributes {stable_mosaic.version = 11 : i64} {
  func.func @autoencoder_kernel(%arg0: i32, %arg1: memref<8x896xf32, #tpu.memory_space<vmem>>, %arg2: memref<896x128xf32, #tpu.memory_space<vmem>>, %arg3: memref<1x128xf32, #tpu.memory_space<vmem>>, %arg4: memref<128x128xf32, #tpu.memory_space<vmem>>, %arg5: memref<1x128xf32, #tpu.memory_space<vmem>>, %arg6: memref<128x128xf32, #tpu.memory_space<vmem>>, %arg7: memref<1x128xf32, #tpu.memory_space<vmem>>, %arg8: memref<128x896xf32, #tpu.memory_space<vmem>>, %arg9: memref<1x896xf32, #tpu.memory_space<vmem>>, %arg10: memref<8x896xf32, #tpu.memory_space<vmem>>) attributes {dimension_semantics = [#tpu.dimension_semantics<parallel>], iteration_bounds = array<i64: 1>, scalar_prefetch = 0 : i64, scratch_operands = 0 : i64, tpu.core_type = #tpu.core_type<tc>, window_params = [{transform_indices = @transform_0, window_bounds = array<i64: 8, 896>}, {pipeline_mode = #tpu.pipeline_mode<synchronous>, transform_indices = @transform_1, window_bounds = array<i64: 896, 128>}, {pipeline_mode = #tpu.pipeline_mode<synchronous>, transform_indices = @transform_2, window_bounds = array<i64: 1, 128>}, {pipeline_mode = #tpu.pipeline_mode<synchronous>, transform_indices = @transform_3, window_bounds = array<i64: 128, 128>}, {pipeline_mode = #tpu.pipeline_mode<synchronous>, transform_indices = @transform_4, window_bounds = array<i64: 1, 128>}, {pipeline_mode = #tpu.pipeline_mode<synchronous>, transform_indices = @transform_5, window_bounds = array<i64: 128, 128>}, {pipeline_mode = #tpu.pipeline_mode<synchronous>, transform_indices = @transform_6, window_bounds = array<i64: 1, 128>}, {pipeline_mode = #tpu.pipeline_mode<synchronous>, transform_indices = @transform_7, window_bounds = array<i64: 128, 896>}, {pipeline_mode = #tpu.pipeline_mode<synchronous>, transform_indices = @transform_8, window_bounds = array<i64: 1, 896>}, {transform_indices = @transform_9, window_bounds = array<i64: 8, 896>}]} {
    %c0 = arith.constant 0 : index
    %c0_0 = arith.constant 0 : index
    %0 = vector.load %arg1[%c0, %c0_0] : memref<8x896xf32, #tpu.memory_space<vmem>>, vector<8x896xf32>
    %c0_1 = arith.constant 0 : index
    %c0_2 = arith.constant 0 : index
    %1 = vector.load %arg2[%c0_1, %c0_2] : memref<896x128xf32, #tpu.memory_space<vmem>>, vector<896x128xf32>
    %cst = arith.constant dense<0.000000e+00> : vector<8x128xf32>
    %2 = tpu.matmul %0, %1, %cst {dimension_numbers = #tpu.dot_dimension_numbers<[1], [0], [0], [1], [0, 0, 1, 1], [], []>} : vector<8x896xf32>, vector<896x128xf32>, vector<8x128xf32> -> vector<8x128xf32>
    %c0_3 = arith.constant 0 : index
    %c0_4 = arith.constant 0 : index
    %3 = vector.load %arg3[%c0_3, %c0_4] : memref<1x128xf32, #tpu.memory_space<vmem>>, vector<1x128xf32>
    %4 = vector.broadcast %3 : vector<1x128xf32> to vector<8x128xf32>
    %5 = arith.addf %2, %4 : vector<8x128xf32>
    %cst_5 = arith.constant 0.000000e+00 : f32
    %6 = vector.broadcast %cst_5 : f32 to vector<8x128xf32>
    %7 = arith.maximumf %5, %6 : vector<8x128xf32>
    %c0_6 = arith.constant 0 : index
    %c0_7 = arith.constant 0 : index
    %8 = vector.load %arg4[%c0_6, %c0_7] : memref<128x128xf32, #tpu.memory_space<vmem>>, vector<128x128xf32>
    %cst_8 = arith.constant dense<0.000000e+00> : vector<8x128xf32>
    %9 = tpu.matmul %7, %8, %cst_8 {dimension_numbers = #tpu.dot_dimension_numbers<[1], [0], [0], [1], [0, 0, 1, 1], [], []>} : vector<8x128xf32>, vector<128x128xf32>, vector<8x128xf32> -> vector<8x128xf32>
    %c0_9 = arith.constant 0 : index
    %c0_10 = arith.constant 0 : index
    %10 = vector.load %arg5[%c0_9, %c0_10] : memref<1x128xf32, #tpu.memory_space<vmem>>, vector<1x128xf32>
    %11 = vector.broadcast %10 : vector<1x128xf32> to vector<8x128xf32>
    %12 = arith.addf %9, %11 : vector<8x128xf32>
    %cst_11 = arith.constant 0.000000e+00 : f32
    %13 = vector.broadcast %cst_11 : f32 to vector<8x128xf32>
    %14 = arith.maximumf %12, %13 : vector<8x128xf32>
    %c0_12 = arith.constant 0 : index
    %c0_13 = arith.constant 0 : index
    %15 = vector.load %arg6[%c0_12, %c0_13] : memref<128x128xf32, #tpu.memory_space<vmem>>, vector<128x128xf32>
    %cst_14 = arith.constant dense<0.000000e+00> : vector<8x128xf32>
    %16 = tpu.matmul %14, %15, %cst_14 {dimension_numbers = #tpu.dot_dimension_numbers<[1], [0], [0], [1], [0, 0, 1, 1], [], []>} : vector<8x128xf32>, vector<128x128xf32>, vector<8x128xf32> -> vector<8x128xf32>
    %c0_15 = arith.constant 0 : index
    %c0_16 = arith.constant 0 : index
    %17 = vector.load %arg7[%c0_15, %c0_16] : memref<1x128xf32, #tpu.memory_space<vmem>>, vector<1x128xf32>
    %18 = vector.broadcast %17 : vector<1x128xf32> to vector<8x128xf32>
    %19 = arith.addf %16, %18 : vector<8x128xf32>
    %cst_17 = arith.constant 0.000000e+00 : f32
    %20 = vector.broadcast %cst_17 : f32 to vector<8x128xf32>
    %21 = arith.maximumf %19, %20 : vector<8x128xf32>
    %c0_18 = arith.constant 0 : index
    %c0_19 = arith.constant 0 : index
    %22 = vector.load %arg8[%c0_18, %c0_19] : memref<128x896xf32, #tpu.memory_space<vmem>>, vector<128x896xf32>
    %cst_20 = arith.constant dense<0.000000e+00> : vector<8x896xf32>
    %23 = tpu.matmul %21, %22, %cst_20 {dimension_numbers = #tpu.dot_dimension_numbers<[1], [0], [0], [1], [0, 0, 1, 1], [], []>} : vector<8x128xf32>, vector<128x896xf32>, vector<8x896xf32> -> vector<8x896xf32>
    %c0_21 = arith.constant 0 : index
    %c0_22 = arith.constant 0 : index
    %24 = vector.load %arg9[%c0_21, %c0_22] : memref<1x896xf32, #tpu.memory_space<vmem>>, vector<1x896xf32>
    %25 = vector.broadcast %24 : vector<1x896xf32> to vector<8x896xf32>
    %26 = arith.addf %23, %25 : vector<8x896xf32>
    %cst_23 = arith.constant 0.000000e+00 : f32
    %27 = vector.broadcast %cst_23 : f32 to vector<8x896xf32>
    %28 = arith.maximumf %26, %27 : vector<8x896xf32>
    %c0_24 = arith.constant 0 : index
    %c0_25 = arith.constant 0 : index
    %29 = vector.load %arg10[%c0_24, %c0_25] : memref<8x896xf32, #tpu.memory_space<vmem>>, vector<8x896xf32>
    tpu.vector_store %arg10[%c0_24, %c0_25], %28 {strides = array<i32>} : memref<8x896xf32, #tpu.memory_space<vmem>>, vector<8x896xf32>,
    return
  }
  func.func @transform_0(%arg0: i32) -> (i32, i32) {
    %c0_i32 = arith.constant 0 : i32
    %c0_i32_0 = arith.constant 0 : i32
    return %arg0, %c0_i32 : i32, i32
  }
  func.func @transform_1(%arg0: i32) -> (i32, i32) {
    %c0_i32 = arith.constant 0 : i32
    %c0_i32_0 = arith.constant 0 : i32
    %c0_i32_1 = arith.constant 0 : i32
    return %c0_i32, %c0_i32_0 : i32, i32
  }
  func.func @transform_2(%arg0: i32) -> (i32, i32) {
    %c0_i32 = arith.constant 0 : i32
    %c0_i32_0 = arith.constant 0 : i32
    %c0_i32_1 = arith.constant 0 : i32
    return %c0_i32, %c0_i32_0 : i32, i32
  }
  func.func @transform_3(%arg0: i32) -> (i32, i32) {
    %c0_i32 = arith.constant 0 : i32
    %c0_i32_0 = arith.constant 0 : i32
    %c0_i32_1 = arith.constant 0 : i32
    return %c0_i32, %c0_i32_0 : i32, i32
  }
  func.func @transform_4(%arg0: i32) -> (i32, i32) {
    %c0_i32 = arith.constant 0 : i32
    %c0_i32_0 = arith.constant 0 : i32
    %c0_i32_1 = arith.constant 0 : i32
    return %c0_i32, %c0_i32_0 : i32, i32
  }
  func.func @transform_5(%arg0: i32) -> (i32, i32) {
    %c0_i32 = arith.constant 0 : i32
    %c0_i32_0 = arith.constant 0 : i32
    %c0_i32_1 = arith.constant 0 : i32
    return %c0_i32, %c0_i32_0 : i32, i32
  }
  func.func @transform_6(%arg0: i32) -> (i32, i32) {
    %c0_i32 = arith.constant 0 : i32
    %c0_i32_0 = arith.constant 0 : i32
    %c0_i32_1 = arith.constant 0 : i32
    return %c0_i32, %c0_i32_0 : i32, i32
  }
  func.func @transform_7(%arg0: i32) -> (i32, i32) {
    %c0_i32 = arith.constant 0 : i32
    %c0_i32_0 = arith.constant 0 : i32
    %c0_i32_1 = arith.constant 0 : i32
    return %c0_i32, %c0_i32_0 : i32, i32
  }
  func.func @transform_8(%arg0: i32) -> (i32, i32) {
    %c0_i32 = arith.constant 0 : i32
    %c0_i32_0 = arith.constant 0 : i32
    %c0_i32_1 = arith.constant 0 : i32
    return %c0_i32, %c0_i32_0 : i32, i32
  }
  func.func @transform_9(%arg0: i32) -> (i32, i32) {
    %c0_i32 = arith.constant 0 : i32
    %c0_i32_0 = arith.constant 0 : i32
    return %arg0, %c0_i32 : i32, i32
  }
}

</mosaic_0001>

<llo_original>
// kernel: tpu_custom_call.1
$region0: #{tpu_custom_call.1}
  #allocation0 [shape = 'u32[]', space=smem, size = 0x4, offset = 0x4, fixed_abs, tag = 'smem constant byte address 0x4 - core index']
  #allocation1 [shape = 'u32[72,128]{1,0:T(1,128)}', space=vmem, size = 0x9000, scoped, tag = 'internal scratch']
  %s0 = inlined_call_operand.hbm [shape: f32[8,896], index: 0, kind: input, shape index: {}]
  %s1 = inlined_call_operand.hbm [shape: f32[896,128], index: 1, kind: input, shape index: {}]
  %s2 = inlined_call_operand.hbm [shape: f32[1,128], index: 2, kind: input, shape index: {}]
  %s3 = inlined_call_operand.hbm [shape: f32[128,128], index: 3, kind: input, shape index: {}]
  %s4 = inlined_call_operand.hbm [shape: f32[1,128], index: 4, kind: input, shape index: {}]
  %s5 = inlined_call_operand.hbm [shape: f32[128,128], index: 5, kind: input, shape index: {}]
  %s6 = inlined_call_operand.hbm [shape: f32[1,128], index: 6, kind: input, shape index: {}]
  %s7 = inlined_call_operand.hbm [shape: f32[128,896], index: 7, kind: input, shape index: {}]
  %s8 = inlined_call_operand.vmem [shape: f32[1,896], index: 8, kind: input, shape index: {}]
  %s9 = inlined_call_operand.hbm [shape: f32[8,896], index: 9, kind: output, shape index: {}]
  %s10 = sld [smem:[#allocation0]]
  $region78: #{tpu_custom_call.1} parent=0
    _
  %s12 = ssub.s32 1, %s10
  %s13 = scalar_select 0, %s12, %s10
  $region1: #{tpu_custom_call.1} parent=0
    #allocation2 [shape = 'u8[28672]{0}', space=vmem, size = 0x7000, scoped, tag = 'input window, operand 0, single buffered']
    #allocation3 [shape = 's32[1]{0}', space=sflag, size = 0x4, scoped, tag = 'scoped memory for tpu_custom_call.1']
    #allocation4 [shape = 's32[1]{0}', space=sflag, size = 0x4, scoped, tag = 'scoped memory for tpu_custom_call.1']
    #allocation5 [shape = 'u8[458752]{0}', space=vmem, size = 0x70000, scoped, tag = 'input window, operand 1, single buffered']
    #allocation6 [shape = 's32[1]{0}', space=sflag, size = 0x4, scoped, tag = 'scoped memory for tpu_custom_call.1']
    #allocation7 [shape = 'u8[512]{0}', space=vmem, size = 0x400, scoped, tag = 'input window, operand 2, single buffered']
    #allocation8 [shape = 'u8[65536]{0}', space=vmem, size = 0x10000, scoped, tag = 'input window, operand 3, single buffered']
    #allocation9 [shape = 's32[1]{0}', space=sflag, size = 0x4, scoped, tag = 'scoped memory for tpu_custom_call.1']
    #allocation10 [shape = 'u8[512]{0}', space=vmem, size = 0x400, scoped, tag = 'input window, operand 4, single buffered']
    #allocation11 [shape = 'u8[65536]{0}', space=vmem, size = 0x10000, scoped, tag = 'input window, operand 5, single buffered']
    #allocation12 [shape = 's32[1]{0}', space=sflag, size = 0x4, scoped, tag = 'scoped memory for tpu_custom_call.1']
    #allocation13 [shape = 'u8[512]{0}', space=vmem, size = 0x400, scoped, tag = 'input window, operand 6, single buffered']
    #allocation14 [shape = 'u8[458752]{0}', space=vmem, size = 0x70000, scoped, tag = 'input window, operand 7, single buffered']
    #allocation15 [shape = 's32[1]{0}', space=sflag, size = 0x4, scoped, tag = 'scoped memory for tpu_custom_call.1']
    #allocation16 [shape = 'u8[28672]{0}', space=vmem, size = 0x7000, scoped, tag = 'output window, operand 0, single buffered']
    %14 = vsyncpa [#allocation3], 0
    %15 = vsyncpa [#allocation6], 0
    %16 = vsyncpa [#allocation9], 0
    %17 = vsyncpa [#allocation12], 0
    %18 = vsyncpa [#allocation15], 0
    %19 = vsyncpa [#allocation4], 0
    // Predicated region
    $region2: #{tpu_custom_call.1} parent=1 // pred_check
      _
    $region3: #{tpu_custom_call.1} parent=1 // pred_check_branch
      %21 = sbr.rel (0) target = $region5
    $region4: #{tpu_custom_call.1} parent=1 // pred_region
      %23 = vsyncadd [#allocation3], 0
      %s25 = sshll.u32 %s0, 4
      %s26 = int_to_ptr.hbm [resolvable:$true] %s25
      %s27 = sshll.u32 [#allocation2], 4
      %s28 = int_to_ptr.vmem [resolvable:$true] %s27
      %30 = dma.hbm_to_vmem [thread:$0]  %s26, 896, %s28, [#allocation3]
    $region5: #{tpu_custom_call.1} parent=1 // pred_fallthru
      _
    // Predicated region
    $region6: #{tpu_custom_call.1} parent=1 // pred_check
      _
    $region7: #{tpu_custom_call.1} parent=1 // pred_check_branch
      %32 = sbr.rel (0) target = $region9
    $region8: #{tpu_custom_call.1} parent=1 // pred_region
      %34 = vsyncadd [#allocation6], 0
      %s35 = sshll.u32 %s1, 4
      %s36 = int_to_ptr.hbm [resolvable:$true] %s35
      %s37 = sshll.u32 [#allocation5], 4
      %s38 = int_to_ptr.vmem [resolvable:$true] %s37
      %43 = dma.hbm_to_vmem [thread:$0]  %s36, 14336, %s38, [#allocation6], 128, 128, 8
    $region9: #{tpu_custom_call.1} parent=1 // pred_fallthru
      _
    // Predicated region
    $region10: #{tpu_custom_call.1} parent=1 // pred_check
      _
    $region11: #{tpu_custom_call.1} parent=1 // pred_check_branch
      %45 = sbr.rel (0) target = $region13
    $region12: #{tpu_custom_call.1} parent=1 // pred_region
      %47 = vsyncadd [#allocation6], 0
      %s49 = sshll.u32 %s2, 4
      %s50 = int_to_ptr.hbm [resolvable:$true] %s49
      %s51 = sshll.u32 [#allocation7], 4
      %s52 = int_to_ptr.vmem [resolvable:$true] %s51
      %54 = dma.hbm_to_vmem [thread:$0]  %s50, 16, %s52, [#allocation6]
    $region13: #{tpu_custom_call.1} parent=1 // pred_fallthru
      _
    // Predicated region
    $region14: #{tpu_custom_call.1} parent=1 // pred_check
      _
    $region15: #{tpu_custom_call.1} parent=1 // pred_check_branch
      %56 = sbr.rel (0) target = $region17
    $region16: #{tpu_custom_call.1} parent=1 // pred_region
      %58 = vsyncadd [#allocation9], 0
      %s59 = sshll.u32 %s3, 4
      %s60 = int_to_ptr.hbm [resolvable:$true] %s59
      %s61 = sshll.u32 [#allocation8], 4
      %s62 = int_to_ptr.vmem [resolvable:$true] %s61
      %67 = dma.hbm_to_vmem [thread:$0]  %s60, 2048, %s62, [#allocation9], 128, 128, 8
    $region17: #{tpu_custom_call.1} parent=1 // pred_fallthru
      _
    // Predicated region
    $region18: #{tpu_custom_call.1} parent=1 // pred_check
      _
    $region19: #{tpu_custom_call.1} parent=1 // pred_check_branch
      %69 = sbr.rel (0) target = $region21
    $region20: #{tpu_custom_call.1} parent=1 // pred_region
      %71 = vsyncadd [#allocation9], 0
      %s73 = sshll.u32 %s4, 4
      %s74 = int_to_ptr.hbm [resolvable:$true] %s73
      %s75 = sshll.u32 [#allocation10], 4
      %s76 = int_to_ptr.vmem [resolvable:$true] %s75
      %78 = dma.hbm_to_vmem [thread:$0]  %s74, 16, %s76, [#allocation9]
    $region21: #{tpu_custom_call.1} parent=1 // pred_fallthru
      _
    // Predicated region
    $region22: #{tpu_custom_call.1} parent=1 // pred_check
      _
    $region23: #{tpu_custom_call.1} parent=1 // pred_check_branch
      %80 = sbr.rel (0) target = $region25
    $region24: #{tpu_custom_call.1} parent=1 // pred_region
      %82 = vsyncadd [#allocation12], 0
      %s83 = sshll.u32 %s5, 4
      %s84 = int_to_ptr.hbm [resolvable:$true] %s83
      %s85 = sshll.u32 [#allocation11], 4
      %s86 = int_to_ptr.vmem [resolvable:$true] %s85
      %91 = dma.hbm_to_vmem [thread:$0]  %s84, 2048, %s86, [#allocation12], 128, 128, 8
    $region25: #{tpu_custom_call.1} parent=1 // pred_fallthru
      _
    // Predicated region
    $region26: #{tpu_custom_call.1} parent=1 // pred_check
      _
    $region27: #{tpu_custom_call.1} parent=1 // pred_check_branch
      %93 = sbr.rel (0) target = $region29
    $region28: #{tpu_custom_call.1} parent=1 // pred_region
      %95 = vsyncadd [#allocation12], 0
      %s97 = sshll.u32 %s6, 4
      %s98 = int_to_ptr.hbm [resolvable:$true] %s97
      %s99 = sshll.u32 [#allocation13], 4
      %s100 = int_to_ptr.vmem [resolvable:$true] %s99
      %102 = dma.hbm_to_vmem [thread:$0]  %s98, 16, %s100, [#allocation12]
    $region29: #{tpu_custom_call.1} parent=1 // pred_fallthru
      _
    // Predicated region
    $region30: #{tpu_custom_call.1} parent=1 // pred_check
      _
    $region31: #{tpu_custom_call.1} parent=1 // pred_check_branch
      %104 = sbr.rel (0) target = $region33
    $region32: #{tpu_custom_call.1} parent=1 // pred_region
      %106 = vsyncadd [#allocation15], 0
      %s107 = sshll.u32 %s7, 4
      %s108 = int_to_ptr.hbm [resolvable:$true] %s107
      %s109 = sshll.u32 [#allocation14], 4
      %s110 = int_to_ptr.vmem [resolvable:$true] %s109
      %115 = dma.hbm_to_vmem [thread:$0]  %s108, 14336, %s110, [#allocation15], 896, 896, 56
    $region33: #{tpu_custom_call.1} parent=1 // pred_fallthru
      _
    // Predicated region
    $region34: #{tpu_custom_call.1} parent=1 // pred_check
      _
    $region35: #{tpu_custom_call.1} parent=1 // pred_check_branch
      %117 = sbr.rel (0) target = $region37
    $region36: #{tpu_custom_call.1} parent=1 // pred_region
      _
    $region37: #{tpu_custom_call.1} parent=1 // pred_fallthru
      _
    // Predicated region
    $region38: #{tpu_custom_call.1} parent=1 // pred_check
      _
    $region39: #{tpu_custom_call.1} parent=1 // pred_check_branch
      %119 = sbr.rel (0) target = $region41
    $region40: #{tpu_custom_call.1} parent=1 // pred_region
      %121 = dma.done [#allocation3], 896
    $region41: #{tpu_custom_call.1} parent=1 // pred_fallthru
      _
    // Predicated region
    $region42: #{tpu_custom_call.1} parent=1 // pred_check
      _
    $region43: #{tpu_custom_call.1} parent=1 // pred_check_branch
      %123 = sbr.rel (0) target = $region45
    $region44: #{tpu_custom_call.1} parent=1 // pred_region
      %125 = dma.done [#allocation6], 14336
    $region45: #{tpu_custom_call.1} parent=1 // pred_fallthru
      _
    // Predicated region
    $region46: #{tpu_custom_call.1} parent=1 // pred_check
      _
    $region47: #{tpu_custom_call.1} parent=1 // pred_check_branch
      %127 = sbr.rel (0) target = $region49
    $region48: #{tpu_custom_call.1} parent=1 // pred_region
      %129 = dma.done [#allocation6], 16
    $region49: #{tpu_custom_call.1} parent=1 // pred_fallthru
      _
    // Predicated region
    $region50: #{tpu_custom_call.1} parent=1 // pred_check
      _
    $region51: #{tpu_custom_call.1} parent=1 // pred_check_branch
      %131 = sbr.rel (0) target = $region53
    $region52: #{tpu_custom_call.1} parent=1 // pred_region
      %133 = dma.done [#allocation9], 2048
    $region53: #{tpu_custom_call.1} parent=1 // pred_fallthru
      _
    // Predicated region
    $region54: #{tpu_custom_call.1} parent=1 // pred_check
      _
    $region55: #{tpu_custom_call.1} parent=1 // pred_check_branch
      %135 = sbr.rel (0) target = $region57
    $region56: #{tpu_custom_call.1} parent=1 // pred_region
      %137 = dma.done [#allocation9], 16
    $region57: #{tpu_custom_call.1} parent=1 // pred_fallthru
      _
    // Predicated region
    $region58: #{tpu_custom_call.1} parent=1 // pred_check
      _
    $region59: #{tpu_custom_call.1} parent=1 // pred_check_branch
      %139 = sbr.rel (0) target = $region61
    $region60: #{tpu_custom_call.1} parent=1 // pred_region
      %141 = dma.done [#allocation12], 2048
    $region61: #{tpu_custom_call.1} parent=1 // pred_fallthru
      _
    // Predicated region
    $region62: #{tpu_custom_call.1} parent=1 // pred_check
      _
    $region63: #{tpu_custom_call.1} parent=1 // pred_check_branch
      %143 = sbr.rel (0) target = $region65
    $region64: #{tpu_custom_call.1} parent=1 // pred_region
      %145 = dma.done [#allocation12], 16
    $region65: #{tpu_custom_call.1} parent=1 // pred_fallthru
      _
    // Predicated region
    $region66: #{tpu_custom_call.1} parent=1 // pred_check
      _
    $region67: #{tpu_custom_call.1} parent=1 // pred_check_branch
      %147 = sbr.rel (0) target = $region69
    $region68: #{tpu_custom_call.1} parent=1 // pred_region
      %149 = dma.done [#allocation15], 14336
    $region69: #{tpu_custom_call.1} parent=1 // pred_fallthru
      _
    %v150 = vld [vmem:[#allocation2] sm:$0xff]
    %v151 = vld [vmem:[#allocation2 + $0x8] sm:$0xff]
    %v152 = vld [vmem:[#allocation2 + $0x10] sm:$0xff]
    %v153 = vld [vmem:[#allocation2 + $0x18] sm:$0xff]
    %v154 = vld [vmem:[#allocation2 + $0x20] sm:$0xff]
    %v155 = vld [vmem:[#allocation2 + $0x28] sm:$0xff]
    %v156 = vld [vmem:[#allocation2 + $0x30] sm:$0xff]
    %v157 = vld [vmem:[#allocation5] sm:$0xff]
    %v158 = vld [vmem:[#allocation5 + $0x8] sm:$0xff]
    %v159 = vld [vmem:[#allocation5 + $0x10] sm:$0xff]
    %v160 = vld [vmem:[#allocation5 + $0x18] sm:$0xff]
    %v161 = vld [vmem:[#allocation5 + $0x20] sm:$0xff]
    %v162 = vld [vmem:[#allocation5 + $0x28] sm:$0xff]
    %v163 = vld [vmem:[#allocation5 + $0x30] sm:$0xff]
    %v164 = vld [vmem:[#allocation5 + $0x38] sm:$0xff]
    %v165 = vld [vmem:[#allocation5 + $0x40] sm:$0xff]
    %v166 = vld [vmem:[#allocation5 + $0x48] sm:$0xff]
    %v167 = vld [vmem:[#allocation5 + $0x50] sm:$0xff]
    %v168 = vld [vmem:[#allocation5 + $0x58] sm:$0xff]
    %v169 = vld [vmem:[#allocation5 + $0x60] sm:$0xff]
    %v170 = vld [vmem:[#allocation5 + $0x68] sm:$0xff]
    %v171 = vld [vmem:[#allocation5 + $0x70] sm:$0xff]
    %v172 = vld [vmem:[#allocation5 + $0x78] sm:$0xff]
    %v173 = vld [vmem:[#allocation5 + $0x80] sm:$0xff]
    %v174 = vld [vmem:[#allocation5 + $0x88] sm:$0xff]
    %v175 = vld [vmem:[#allocation5 + $0x90] sm:$0xff]
    %v176 = vld [vmem:[#allocation5 + $0x98] sm:$0xff]
    %v177 = vld [vmem:[#allocation5 + $0xa0] sm:$0xff]
    %v178 = vld [vmem:[#allocation5 + $0xa8] sm:$0xff]
    %v179 = vld [vmem:[#allocation5 + $0xb0] sm:$0xff]
    %v180 = vld [vmem:[#allocation5 + $0xb8] sm:$0xff]
    %v181 = vld [vmem:[#allocation5 + $0xc0] sm:$0xff]
    %v182 = vld [vmem:[#allocation5 + $0xc8] sm:$0xff]
    %v183 = vld [vmem:[#allocation5 + $0xd0] sm:$0xff]
    %v184 = vld [vmem:[#allocation5 + $0xd8] sm:$0xff]
    %v185 = vld [vmem:[#allocation5 + $0xe0] sm:$0xff]
    %v186 = vld [vmem:[#allocation5 + $0xe8] sm:$0xff]
    %v187 = vld [vmem:[#allocation5 + $0xf0] sm:$0xff]
    %v188 = vld [vmem:[#allocation5 + $0xf8] sm:$0xff]
    %v189 = vld [vmem:[#allocation5 + $0x100] sm:$0xff]
    %v190 = vld [vmem:[#allocation5 + $0x108] sm:$0xff]
    %v191 = vld [vmem:[#allocation5 + $0x110] sm:$0xff]
    %v192 = vld [vmem:[#allocation5 + $0x118] sm:$0xff]
    %v193 = vld [vmem:[#allocation5 + $0x120] sm:$0xff]
    %v194 = vld [vmem:[#allocation5 + $0x128] sm:$0xff]
    %v195 = vld [vmem:[#allocation5 + $0x130] sm:$0xff]
    %v196 = vld [vmem:[#allocation5 + $0x138] sm:$0xff]
    %v197 = vld [vmem:[#allocation5 + $0x140] sm:$0xff]
    %v198 = vld [vmem:[#allocation5 + $0x148] sm:$0xff]
    %v199 = vld [vmem:[#allocation5 + $0x150] sm:$0xff]
    %v200 = vld [vmem:[#allocation5 + $0x158] sm:$0xff]
    %v201 = vld [vmem:[#allocation5 + $0x160] sm:$0xff]
    %v202 = vld [vmem:[#allocation5 + $0x168] sm:$0xff]
    %v203 = vld [vmem:[#allocation5 + $0x170] sm:$0xff]
    %v204 = vld [vmem:[#allocation5 + $0x178] sm:$0xff]
    %v205 = vld [vmem:[#allocation5 + $0x180] sm:$0xff]
    %v206 = vld [vmem:[#allocation5 + $0x188] sm:$0xff]
    %v207 = vld [vmem:[#allocation5 + $0x190] sm:$0xff]
    %v208 = vld [vmem:[#allocation5 + $0x198] sm:$0xff]
    %v209 = vld [vmem:[#allocation5 + $0x1a0] sm:$0xff]
    %v210 = vld [vmem:[#allocation5 + $0x1a8] sm:$0xff]
    %v211 = vld [vmem:[#allocation5 + $0x1b0] sm:$0xff]
    %v212 = vld [vmem:[#allocation5 + $0x1b8] sm:$0xff]
    %v213 = vld [vmem:[#allocation5 + $0x1c0] sm:$0xff]
    %v214 = vld [vmem:[#allocation5 + $0x1c8] sm:$0xff]
    %v215 = vld [vmem:[#allocation5 + $0x1d0] sm:$0xff]
    %v216 = vld [vmem:[#allocation5 + $0x1d8] sm:$0xff]
    %v217 = vld [vmem:[#allocation5 + $0x1e0] sm:$0xff]
    %v218 = vld [vmem:[#allocation5 + $0x1e8] sm:$0xff]
    %v219 = vld [vmem:[#allocation5 + $0x1f0] sm:$0xff]
    %v220 = vld [vmem:[#allocation5 + $0x1f8] sm:$0xff]
    %v221 = vld [vmem:[#allocation5 + $0x200] sm:$0xff]
    %v222 = vld [vmem:[#allocation5 + $0x208] sm:$0xff]
    %v223 = vld [vmem:[#allocation5 + $0x210] sm:$0xff]
    %v224 = vld [vmem:[#allocation5 + $0x218] sm:$0xff]
    %v225 = vld [vmem:[#allocation5 + $0x220] sm:$0xff]
    %v226 = vld [vmem:[#allocation5 + $0x228] sm:$0xff]
    %v227 = vld [vmem:[#allocation5 + $0x230] sm:$0xff]
    %v228 = vld [vmem:[#allocation5 + $0x238] sm:$0xff]
    %v229 = vld [vmem:[#allocation5 + $0x240] sm:$0xff]
    %v230 = vld [vmem:[#allocation5 + $0x248] sm:$0xff]
    %v231 = vld [vmem:[#allocation5 + $0x250] sm:$0xff]
    %v232 = vld [vmem:[#allocation5 + $0x258] sm:$0xff]
    %v233 = vld [vmem:[#allocation5 + $0x260] sm:$0xff]
    %v234 = vld [vmem:[#allocation5 + $0x268] sm:$0xff]
    %v235 = vld [vmem:[#allocation5 + $0x270] sm:$0xff]
    %v236 = vld [vmem:[#allocation5 + $0x278] sm:$0xff]
    %v237 = vld [vmem:[#allocation5 + $0x280] sm:$0xff]
    %v238 = vld [vmem:[#allocation5 + $0x288] sm:$0xff]
    %v239 = vld [vmem:[#allocation5 + $0x290] sm:$0xff]
    %v240 = vld [vmem:[#allocation5 + $0x298] sm:$0xff]
    %v241 = vld [vmem:[#allocation5 + $0x2a0] sm:$0xff]
    %v242 = vld [vmem:[#allocation5 + $0x2a8] sm:$0xff]
    %v243 = vld [vmem:[#allocation5 + $0x2b0] sm:$0xff]
    %v244 = vld [vmem:[#allocation5 + $0x2b8] sm:$0xff]
    %v245 = vld [vmem:[#allocation5 + $0x2c0] sm:$0xff]
    %v246 = vld [vmem:[#allocation5 + $0x2c8] sm:$0xff]
    %v247 = vld [vmem:[#allocation5 + $0x2d0] sm:$0xff]
    %v248 = vld [vmem:[#allocation5 + $0x2d8] sm:$0xff]
    %v249 = vld [vmem:[#allocation5 + $0x2e0] sm:$0xff]
    %v250 = vld [vmem:[#allocation5 + $0x2e8] sm:$0xff]
    %v251 = vld [vmem:[#allocation5 + $0x2f0] sm:$0xff]
    %v252 = vld [vmem:[#allocation5 + $0x2f8] sm:$0xff]
    %v253 = vld [vmem:[#allocation5 + $0x300] sm:$0xff]
    %v254 = vld [vmem:[#allocation5 + $0x308] sm:$0xff]
    %v255 = vld [vmem:[#allocation5 + $0x310] sm:$0xff]
    %v256 = vld [vmem:[#allocation5 + $0x318] sm:$0xff]
    %v257 = vld [vmem:[#allocation5 + $0x320] sm:$0xff]
    %v258 = vld [vmem:[#allocation5 + $0x328] sm:$0xff]
    %v259 = vld [vmem:[#allocation5 + $0x330] sm:$0xff]
    %v260 = vld [vmem:[#allocation5 + $0x338] sm:$0xff]
    %v261 = vld [vmem:[#allocation5 + $0x340] sm:$0xff]
    %v262 = vld [vmem:[#allocation5 + $0x348] sm:$0xff]
    %v263 = vld [vmem:[#allocation5 + $0x350] sm:$0xff]
    %v264 = vld [vmem:[#allocation5 + $0x358] sm:$0xff]
    %v265 = vld [vmem:[#allocation5 + $0x360] sm:$0xff]
    %v266 = vld [vmem:[#allocation5 + $0x368] sm:$0xff]
    %v267 = vld [vmem:[#allocation5 + $0x370] sm:$0xff]
    %v268 = vld [vmem:[#allocation5 + $0x378] sm:$0xff]
    %v269 = vld [vmem:[#allocation7] sm:$0x1]
    %v271 = vperm.slane %v269, 0
    %273 = vmatpush.msra.mxu0 %v172
    %274 = vmatpush.msra.mxu0 %v171
    %275 = vmatpush.msra.mxu0 %v170
    %276 = vmatpush.msra.mxu0 %v169
    %277 = vmatpush.msra.mxu0 %v168
    %278 = vmatpush.msra.mxu0 %v167
    %279 = vmatpush.msra.mxu0 %v166
    %280 = vmatpush.msra.mxu0 %v165
    %281 = vmatpush.msra.mxu0 %v164
    %282 = vmatpush.msra.mxu0 %v163
    %283 = vmatpush.msra.mxu0 %v162
    %284 = vmatpush.msra.mxu0 %v161
    %285 = vmatpush.msra.mxu0 %v160
    %286 = vmatpush.msra.mxu0 %v159
    %287 = vmatpush.msra.mxu0 %v158
    %288 = vmatpush.msra.mxu0 %v157
    %289 = vmatmul.f32.gmra.mxu0 %v150
    %v290 = vpop.f32.mrf.mxu0
    %v291 = vadd.f32 %v271, %v290
    %292 = vdwg.mxu0
    %293 = vmatpush.msra.mxu0 %v188
    %294 = vmatpush.msra.mxu0 %v187
    %295 = vmatpush.msra.mxu0 %v186
    %296 = vmatpush.msra.mxu0 %v185
    %297 = vmatpush.msra.mxu0 %v184
    %298 = vmatpush.msra.mxu0 %v183
    %299 = vmatpush.msra.mxu0 %v182
    %300 = vmatpush.msra.mxu0 %v181
    %301 = vmatpush.msra.mxu0 %v180
    %302 = vmatpush.msra.mxu0 %v179
    %303 = vmatpush.msra.mxu0 %v178
    %304 = vmatpush.msra.mxu0 %v177
    %305 = vmatpush.msra.mxu0 %v176
    %306 = vmatpush.msra.mxu0 %v175
    %307 = vmatpush.msra.mxu0 %v174
    %308 = vmatpush.msra.mxu0 %v173
    %309 = vmatmul.f32.gmra.mxu0 %v151
    %v310 = vpop.f32.mrf.mxu0
    %v311 = vadd.f32 %v291, %v310
    %312 = vdwg.mxu0
    %313 = vmatpush.msra.mxu0 %v204
    %314 = vmatpush.msra.mxu0 %v203
    %315 = vmatpush.msra.mxu0 %v202
    %316 = vmatpush.msra.mxu0 %v201
    %317 = vmatpush.msra.mxu0 %v200
    %318 = vmatpush.msra.mxu0 %v199
    %319 = vmatpush.msra.mxu0 %v198
    %320 = vmatpush.msra.mxu0 %v197
    %321 = vmatpush.msra.mxu0 %v196
    %322 = vmatpush.msra.mxu0 %v195
    %323 = vmatpush.msra.mxu0 %v194
    %324 = vmatpush.msra.mxu0 %v193
    %325 = vmatpush.msra.mxu0 %v192
    %326 = vmatpush.msra.mxu0 %v191
    %327 = vmatpush.msra.mxu0 %v190
    %328 = vmatpush.msra.mxu0 %v189
    %329 = vmatmul.f32.gmra.mxu0 %v152
    %v330 = vpop.f32.mrf.mxu0
    %v331 = vadd.f32 %v311, %v330
    %332 = vdwg.mxu0
    %333 = vmatpush.msra.mxu0 %v220
    %334 = vmatpush.msra.mxu0 %v219
    %335 = vmatpush.msra.mxu0 %v218
    %336 = vmatpush.msra.mxu0 %v217
    %337 = vmatpush.msra.mxu0 %v216
    %338 = vmatpush.msra.mxu0 %v215
    %339 = vmatpush.msra.mxu0 %v214
    %340 = vmatpush.msra.mxu0 %v213
    %341 = vmatpush.msra.mxu0 %v212
    %342 = vmatpush.msra.mxu0 %v211
    %343 = vmatpush.msra.mxu0 %v210
    %344 = vmatpush.msra.mxu0 %v209
    %345 = vmatpush.msra.mxu0 %v208
    %346 = vmatpush.msra.mxu0 %v207
    %347 = vmatpush.msra.mxu0 %v206
    %348 = vmatpush.msra.mxu0 %v205
    %349 = vmatmul.f32.gmra.mxu0 %v153
    %v350 = vpop.f32.mrf.mxu0
    %v351 = vadd.f32 %v331, %v350
    %352 = vdwg.mxu0
    %353 = vmatpush.msra.mxu0 %v236
    %354 = vmatpush.msra.mxu0 %v235
    %355 = vmatpush.msra.mxu0 %v234
    %356 = vmatpush.msra.mxu0 %v233
    %357 = vmatpush.msra.mxu0 %v232
    %358 = vmatpush.msra.mxu0 %v231
    %359 = vmatpush.msra.mxu0 %v230
    %360 = vmatpush.msra.mxu0 %v229
    %361 = vmatpush.msra.mxu0 %v228
    %362 = vmatpush.msra.mxu0 %v227
    %363 = vmatpush.msra.mxu0 %v226
    %364 = vmatpush.msra.mxu0 %v225
    %365 = vmatpush.msra.mxu0 %v224
    %366 = vmatpush.msra.mxu0 %v223
    %367 = vmatpush.msra.mxu0 %v222
    %368 = vmatpush.msra.mxu0 %v221
    %369 = vmatmul.f32.gmra.mxu0 %v154
    %v370 = vpop.f32.mrf.mxu0
    %v371 = vadd.f32 %v351, %v370
    %372 = vdwg.mxu0
    %373 = vmatpush.msra.mxu0 %v252
    %374 = vmatpush.msra.mxu0 %v251
    %375 = vmatpush.msra.mxu0 %v250
    %376 = vmatpush.msra.mxu0 %v249
    %377 = vmatpush.msra.mxu0 %v248
    %378 = vmatpush.msra.mxu0 %v247
    %379 = vmatpush.msra.mxu0 %v246
    %380 = vmatpush.msra.mxu0 %v245
    %381 = vmatpush.msra.mxu0 %v244
    %382 = vmatpush.msra.mxu0 %v243
    %383 = vmatpush.msra.mxu0 %v242
    %384 = vmatpush.msra.mxu0 %v241
    %385 = vmatpush.msra.mxu0 %v240
    %386 = vmatpush.msra.mxu0 %v239
    %387 = vmatpush.msra.mxu0 %v238
    %388 = vmatpush.msra.mxu0 %v237
    %389 = vmatmul.f32.gmra.mxu0 %v155
    %v390 = vpop.f32.mrf.mxu0
    %v391 = vadd.f32 %v371, %v390
    %392 = vdwg.mxu0
    %393 = vmatpush.msra.mxu0 %v268
    %394 = vmatpush.msra.mxu0 %v267
    %395 = vmatpush.msra.mxu0 %v266
    %396 = vmatpush.msra.mxu0 %v265
    %397 = vmatpush.msra.mxu0 %v264
    %398 = vmatpush.msra.mxu0 %v263
    %399 = vmatpush.msra.mxu0 %v262
    %400 = vmatpush.msra.mxu0 %v261
    %401 = vmatpush.msra.mxu0 %v260
    %402 = vmatpush.msra.mxu0 %v259
    %403 = vmatpush.msra.mxu0 %v258
    %404 = vmatpush.msra.mxu0 %v257
    %405 = vmatpush.msra.mxu0 %v256
    %406 = vmatpush.msra.mxu0 %v255
    %407 = vmatpush.msra.mxu0 %v254
    %408 = vmatpush.msra.mxu0 %v253
    %409 = vmatmul.f32.gmra.mxu0 %v156
    %v410 = vpop.f32.mrf.mxu0
    %v411 = vadd.f32 %v391, %v410
    %412 = vdwg.mxu0
    %v413 = vmax.f32 %v411, 0.0
    %v414 = vld [vmem:[#allocation8] sm:$0xff]
    %v415 = vld [vmem:[#allocation8 + $0x8] sm:$0xff]
    %v416 = vld [vmem:[#allocation8 + $0x10] sm:$0xff]
    %v417 = vld [vmem:[#allocation8 + $0x18] sm:$0xff]
    %v418 = vld [vmem:[#allocation8 + $0x20] sm:$0xff]
    %v419 = vld [vmem:[#allocation8 + $0x28] sm:$0xff]
    %v420 = vld [vmem:[#allocation8 + $0x30] sm:$0xff]
    %v421 = vld [vmem:[#allocation8 + $0x38] sm:$0xff]
    %v422 = vld [vmem:[#allocation8 + $0x40] sm:$0xff]
    %v423 = vld [vmem:[#allocation8 + $0x48] sm:$0xff]
    %v424 = vld [vmem:[#allocation8 + $0x50] sm:$0xff]
    %v425 = vld [vmem:[#allocation8 + $0x58] sm:$0xff]
    %v426 = vld [vmem:[#allocation8 + $0x60] sm:$0xff]
    %v427 = vld [vmem:[#allocation8 + $0x68] sm:$0xff]
    %v428 = vld [vmem:[#allocation8 + $0x70] sm:$0xff]
    %v429 = vld [vmem:[#allocation8 + $0x78] sm:$0xff]
    %v430 = vld [vmem:[#allocation10] sm:$0x1]
    %v432 = vperm.slane %v430, 0
    %434 = vmatpush.msra.mxu0 %v429
    %435 = vmatpush.msra.mxu0 %v428
    %436 = vmatpush.msra.mxu0 %v427
    %437 = vmatpush.msra.mxu0 %v426
    %438 = vmatpush.msra.mxu0 %v425
    %439 = vmatpush.msra.mxu0 %v424
    %440 = vmatpush.msra.mxu0 %v423
    %441 = vmatpush.msra.mxu0 %v422
    %442 = vmatpush.msra.mxu0 %v421
    %443 = vmatpush.msra.mxu0 %v420
    %444 = vmatpush.msra.mxu0 %v419
    %445 = vmatpush.msra.mxu0 %v418
    %446 = vmatpush.msra.mxu0 %v417
    %447 = vmatpush.msra.mxu0 %v416
    %448 = vmatpush.msra.mxu0 %v415
    %449 = vmatpush.msra.mxu0 %v414
    %450 = vmatmul.f32.gmra.mxu0 %v413
    %v451 = vpop.f32.mrf.mxu0
    %v452 = vadd.f32 %v432, %v451
    %453 = vdwg.mxu0
    %v454 = vmax.f32 %v452, 0.0
    %v455 = vld [vmem:[#allocation11] sm:$0xff]
    %v456 = vld [vmem:[#allocation11 + $0x8] sm:$0xff]
    %v457 = vld [vmem:[#allocation11 + $0x10] sm:$0xff]
    %v458 = vld [vmem:[#allocation11 + $0x18] sm:$0xff]
    %v459 = vld [vmem:[#allocation11 + $0x20] sm:$0xff]
    %v460 = vld [vmem:[#allocation11 + $0x28] sm:$0xff]
    %v461 = vld [vmem:[#allocation11 + $0x30] sm:$0xff]
    %v462 = vld [vmem:[#allocation11 + $0x38] sm:$0xff]
    %v463 = vld [vmem:[#allocation11 + $0x40] sm:$0xff]
    %v464 = vld [vmem:[#allocation11 + $0x48] sm:$0xff]
    %v465 = vld [vmem:[#allocation11 + $0x50] sm:$0xff]
    %v466 = vld [vmem:[#allocation11 + $0x58] sm:$0xff]
    %v467 = vld [vmem:[#allocation11 + $0x60] sm:$0xff]
    %v468 = vld [vmem:[#allocation11 + $0x68] sm:$0xff]
    %v469 = vld [vmem:[#allocation11 + $0x70] sm:$0xff]
    %v470 = vld [vmem:[#allocation11 + $0x78] sm:$0xff]
    %v471 = vld [vmem:[#allocation13] sm:$0x1]
    %v473 = vperm.slane %v471, 0
    %475 = vmatpush.msra.mxu0 %v470
    %476 = vmatpush.msra.mxu0 %v469
    %477 = vmatpush.msra.mxu0 %v468
    %478 = vmatpush.msra.mxu0 %v467
    %479 = vmatpush.msra.mxu0 %v466
    %480 = vmatpush.msra.mxu0 %v465
    %481 = vmatpush.msra.mxu0 %v464
    %482 = vmatpush.msra.mxu0 %v463
    %483 = vmatpush.msra.mxu0 %v462
    %484 = vmatpush.msra.mxu0 %v461
    %485 = vmatpush.msra.mxu0 %v460
    %486 = vmatpush.msra.mxu0 %v459
    %487 = vmatpush.msra.mxu0 %v458
    %488 = vmatpush.msra.mxu0 %v457
    %489 = vmatpush.msra.mxu0 %v456
    %490 = vmatpush.msra.mxu0 %v455
    %491 = vmatmul.f32.gmra.mxu0 %v454
    %v492 = vpop.f32.mrf.mxu0
    %v493 = vadd.f32 %v473, %v492
    %494 = vdwg.mxu0
    %v495 = vmax.f32 %v493, 0.0
    %v496 = vld [vmem:[#allocation14] sm:$0xff]
    %v497 = vld [vmem:[#allocation14 + $0x8] sm:$0xff]
    %v498 = vld [vmem:[#allocation14 + $0x10] sm:$0xff]
    %v499 = vld [vmem:[#allocation14 + $0x18] sm:$0xff]
    %v500 = vld [vmem:[#allocation14 + $0x20] sm:$0xff]
    %v501 = vld [vmem:[#allocation14 + $0x28] sm:$0xff]
    %v502 = vld [vmem:[#allocation14 + $0x30] sm:$0xff]
    %v503 = vld [vmem:[#allocation14 + $0x38] sm:$0xff]
    %v504 = vld [vmem:[#allocation14 + $0x40] sm:$0xff]
    %v505 = vld [vmem:[#allocation14 + $0x48] sm:$0xff]
    %v506 = vld [vmem:[#allocation14 + $0x50] sm:$0xff]
    %v507 = vld [vmem:[#allocation14 + $0x58] sm:$0xff]
    %v508 = vld [vmem:[#allocation14 + $0x60] sm:$0xff]
    %v509 = vld [vmem:[#allocation14 + $0x68] sm:$0xff]
    %v510 = vld [vmem:[#allocation14 + $0x70] sm:$0xff]
    %v511 = vld [vmem:[#allocation14 + $0x78] sm:$0xff]
    %v512 = vld [vmem:[#allocation14 + $0x80] sm:$0xff]
    %v513 = vld [vmem:[#allocation14 + $0x88] sm:$0xff]
    %v514 = vld [vmem:[#allocation14 + $0x90] sm:$0xff]
    %v515 = vld [vmem:[#allocation14 + $0x98] sm:$0xff]
    %v516 = vld [vmem:[#allocation14 + $0xa0] sm:$0xff]
    %v517 = vld [vmem:[#allocation14 + $0xa8] sm:$0xff]
    %v518 = vld [vmem:[#allocation14 + $0xb0] sm:$0xff]
    %v519 = vld [vmem:[#allocation14 + $0xb8] sm:$0xff]
    %v520 = vld [vmem:[#allocation14 + $0xc0] sm:$0xff]
    %v521 = vld [vmem:[#allocation14 + $0xc8] sm:$0xff]
    %v522 = vld [vmem:[#allocation14 + $0xd0] sm:$0xff]
    %v523 = vld [vmem:[#allocation14 + $0xd8] sm:$0xff]
    %v524 = vld [vmem:[#allocation14 + $0xe0] sm:$0xff]
    %v525 = vld [vmem:[#allocation14 + $0xe8] sm:$0xff]
    %v526 = vld [vmem:[#allocation14 + $0xf0] sm:$0xff]
    %v527 = vld [vmem:[#allocation14 + $0xf8] sm:$0xff]
    %v528 = vld [vmem:[#allocation14 + $0x100] sm:$0xff]
    %v529 = vld [vmem:[#allocation14 + $0x108] sm:$0xff]
    %v530 = vld [vmem:[#allocation14 + $0x110] sm:$0xff]
    %v531 = vld [vmem:[#allocation14 + $0x118] sm:$0xff]
    %v532 = vld [vmem:[#allocation14 + $0x120] sm:$0xff]
    %v533 = vld [vmem:[#allocation14 + $0x128] sm:$0xff]
    %v534 = vld [vmem:[#allocation14 + $0x130] sm:$0xff]
    %v535 = vld [vmem:[#allocation14 + $0x138] sm:$0xff]
    %v536 = vld [vmem:[#allocation14 + $0x140] sm:$0xff]
    %v537 = vld [vmem:[#allocation14 + $0x148] sm:$0xff]
    %v538 = vld [vmem:[#allocation14 + $0x150] sm:$0xff]
    %v539 = vld [vmem:[#allocation14 + $0x158] sm:$0xff]
    %v540 = vld [vmem:[#allocation14 + $0x160] sm:$0xff]
    %v541 = vld [vmem:[#allocation14 + $0x168] sm:$0xff]
    %v542 = vld [vmem:[#allocation14 + $0x170] sm:$0xff]
    %v543 = vld [vmem:[#allocation14 + $0x178] sm:$0xff]
    %v544 = vld [vmem:[#allocation14 + $0x180] sm:$0xff]
    %v545 = vld [vmem:[#allocation14 + $0x188] sm:$0xff]
    %v546 = vld [vmem:[#allocation14 + $0x190] sm:$0xff]
    %v547 = vld [vmem:[#allocation14 + $0x198] sm:$0xff]
    %v548 = vld [vmem:[#allocation14 + $0x1a0] sm:$0xff]
    %v549 = vld [vmem:[#allocation14 + $0x1a8] sm:$0xff]
    %v550 = vld [vmem:[#allocation14 + $0x1b0] sm:$0xff]
    %v551 = vld [vmem:[#allocation14 + $0x1b8] sm:$0xff]
    %v552 = vld [vmem:[#allocation14 + $0x1c0] sm:$0xff]
    %v553 = vld [vmem:[#allocation14 + $0x1c8] sm:$0xff]
    %v554 = vld [vmem:[#allocation14 + $0x1d0] sm:$0xff]
    %v555 = vld [vmem:[#allocation14 + $0x1d8] sm:$0xff]
    %v556 = vld [vmem:[#allocation14 + $0x1e0] sm:$0xff]
    %v557 = vld [vmem:[#allocation14 + $0x1e8] sm:$0xff]
    %v558 = vld [vmem:[#allocation14 + $0x1f0] sm:$0xff]
    %v559 = vld [vmem:[#allocation14 + $0x1f8] sm:$0xff]
    %v560 = vld [vmem:[#allocation14 + $0x200] sm:$0xff]
    %v561 = vld [vmem:[#allocation14 + $0x208] sm:$0xff]
    %v562 = vld [vmem:[#allocation14 + $0x210] sm:$0xff]
    %v563 = vld [vmem:[#allocation14 + $0x218] sm:$0xff]
    %v564 = vld [vmem:[#allocation14 + $0x220] sm:$0xff]
    %v565 = vld [vmem:[#allocation14 + $0x228] sm:$0xff]
    %v566 = vld [vmem:[#allocation14 + $0x230] sm:$0xff]
    %v567 = vld [vmem:[#allocation14 + $0x238] sm:$0xff]
    %v568 = vld [vmem:[#allocation14 + $0x240] sm:$0xff]
    %v569 = vld [vmem:[#allocation14 + $0x248] sm:$0xff]
    %v570 = vld [vmem:[#allocation14 + $0x250] sm:$0xff]
    %v571 = vld [vmem:[#allocation14 + $0x258] sm:$0xff]
    %v572 = vld [vmem:[#allocation14 + $0x260] sm:$0xff]
    %v573 = vld [vmem:[#allocation14 + $0x268] sm:$0xff]
    %v574 = vld [vmem:[#allocation14 + $0x270] sm:$0xff]
    %v575 = vld [vmem:[#allocation14 + $0x278] sm:$0xff]
    %v576 = vld [vmem:[#allocation14 + $0x280] sm:$0xff]
    %v577 = vld [vmem:[#allocation14 + $0x288] sm:$0xff]
    %v578 = vld [vmem:[#allocation14 + $0x290] sm:$0xff]
    %v579 = vld [vmem:[#allocation14 + $0x298] sm:$0xff]
    %v580 = vld [vmem:[#allocation14 + $0x2a0] sm:$0xff]
    %v581 = vld [vmem:[#allocation14 + $0x2a8] sm:$0xff]
    %v582 = vld [vmem:[#allocation14 + $0x2b0] sm:$0xff]
    %v583 = vld [vmem:[#allocation14 + $0x2b8] sm:$0xff]
    %v584 = vld [vmem:[#allocation14 + $0x2c0] sm:$0xff]
    %v585 = vld [vmem:[#allocation14 + $0x2c8] sm:$0xff]
    %v586 = vld [vmem:[#allocation14 + $0x2d0] sm:$0xff]
    %v587 = vld [vmem:[#allocation14 + $0x2d8] sm:$0xff]
    %v588 = vld [vmem:[#allocation14 + $0x2e0] sm:$0xff]
    %v589 = vld [vmem:[#allocation14 + $0x2e8] sm:$0xff]
    %v590 = vld [vmem:[#allocation14 + $0x2f0] sm:$0xff]
    %v591 = vld [vmem:[#allocation14 + $0x2f8] sm:$0xff]
    %v592 = vld [vmem:[#allocation14 + $0x300] sm:$0xff]
    %v593 = vld [vmem:[#allocation14 + $0x308] sm:$0xff]
    %v594 = vld [vmem:[#allocation14 + $0x310] sm:$0xff]
    %v595 = vld [vmem:[#allocation14 + $0x318] sm:$0xff]
    %v596 = vld [vmem:[#allocation14 + $0x320] sm:$0xff]
    %v597 = vld [vmem:[#allocation14 + $0x328] sm:$0xff]
    %v598 = vld [vmem:[#allocation14 + $0x330] sm:$0xff]
    %v599 = vld [vmem:[#allocation14 + $0x338] sm:$0xff]
    %v600 = vld [vmem:[#allocation14 + $0x340] sm:$0xff]
    %v601 = vld [vmem:[#allocation14 + $0x348] sm:$0xff]
    %v602 = vld [vmem:[#allocation14 + $0x350] sm:$0xff]
    %v603 = vld [vmem:[#allocation14 + $0x358] sm:$0xff]
    %v604 = vld [vmem:[#allocation14 + $0x360] sm:$0xff]
    %v605 = vld [vmem:[#allocation14 + $0x368] sm:$0xff]
    %v606 = vld [vmem:[#allocation14 + $0x370] sm:$0xff]
    %v607 = vld [vmem:[#allocation14 + $0x378] sm:$0xff]
    %v608 = vld [vmem:[%s8] sm:$0xff]
    %v610 = vperm.slane %v608, 0
    %v611 = vperm.slane %v608, 1
    %v612 = vperm.slane %v608, 2
    %v613 = vperm.slane %v608, 3
    %v614 = vperm.slane %v608, 4
    %v615 = vperm.slane %v608, 5
    %v616 = vperm.slane %v608, 6
    %624 = vmatpush.msra.mxu0 %v601
    %625 = vmatpush.msra.mxu0 %v594
    %626 = vmatpush.msra.mxu0 %v587
    %627 = vmatpush.msra.mxu0 %v580
    %628 = vmatpush.msra.mxu0 %v573
    %629 = vmatpush.msra.mxu0 %v566
    %630 = vmatpush.msra.mxu0 %v559
    %631 = vmatpush.msra.mxu0 %v552
    %632 = vmatpush.msra.mxu0 %v545
    %633 = vmatpush.msra.mxu0 %v538
    %634 = vmatpush.msra.mxu0 %v531
    %635 = vmatpush.msra.mxu0 %v524
    %636 = vmatpush.msra.mxu0 %v517
    %637 = vmatpush.msra.mxu0 %v510
    %638 = vmatpush.msra.mxu0 %v503
    %639 = vmatpush.msra.mxu0 %v496
    %640 = vmatmul.f32.gmra.mxu0 %v495
    %v641 = vpop.f32.mrf.mxu0
    %v642 = vadd.f32 %v610, %v641
    %643 = vdwg.mxu0
    %644 = vmatpush.msra.mxu0 %v602
    %645 = vmatpush.msra.mxu0 %v595
    %646 = vmatpush.msra.mxu0 %v588
    %647 = vmatpush.msra.mxu0 %v581
    %648 = vmatpush.msra.mxu0 %v574
    %649 = vmatpush.msra.mxu0 %v567
    %650 = vmatpush.msra.mxu0 %v560
    %651 = vmatpush.msra.mxu0 %v553
    %652 = vmatpush.msra.mxu0 %v546
    %653 = vmatpush.msra.mxu0 %v539
    %654 = vmatpush.msra.mxu0 %v532
    %655 = vmatpush.msra.mxu0 %v525
    %656 = vmatpush.msra.mxu0 %v518
    %657 = vmatpush.msra.mxu0 %v511
    %658 = vmatpush.msra.mxu0 %v504
    %659 = vmatpush.msra.mxu0 %v497
    %660 = vmatmul.f32.gmra.mxu0 %v495
    %v661 = vpop.f32.mrf.mxu0
    %v662 = vadd.f32 %v611, %v661
    %663 = vdwg.mxu0
    %664 = vmatpush.msra.mxu0 %v603
    %665 = vmatpush.msra.mxu0 %v596
    %666 = vmatpush.msra.mxu0 %v589
    %667 = vmatpush.msra.mxu0 %v582
    %668 = vmatpush.msra.mxu0 %v575
    %669 = vmatpush.msra.mxu0 %v568
    %670 = vmatpush.msra.mxu0 %v561
    %671 = vmatpush.msra.mxu0 %v554
    %672 = vmatpush.msra.mxu0 %v547
    %673 = vmatpush.msra.mxu0 %v540
    %674 = vmatpush.msra.mxu0 %v533
    %675 = vmatpush.msra.mxu0 %v526
    %676 = vmatpush.msra.mxu0 %v519
    %677 = vmatpush.msra.mxu0 %v512
    %678 = vmatpush.msra.mxu0 %v505
    %679 = vmatpush.msra.mxu0 %v498
    %680 = vmatmul.f32.gmra.mxu0 %v495
    %v681 = vpop.f32.mrf.mxu0
    %v682 = vadd.f32 %v612, %v681
    %683 = vdwg.mxu0
    %684 = vmatpush.msra.mxu0 %v604
    %685 = vmatpush.msra.mxu0 %v597
    %686 = vmatpush.msra.mxu0 %v590
    %687 = vmatpush.msra.mxu0 %v583
    %688 = vmatpush.msra.mxu0 %v576
    %689 = vmatpush.msra.mxu0 %v569
    %690 = vmatpush.msra.mxu0 %v562
    %691 = vmatpush.msra.mxu0 %v555
    %692 = vmatpush.msra.mxu0 %v548
    %693 = vmatpush.msra.mxu0 %v541
    %694 = vmatpush.msra.mxu0 %v534
    %695 = vmatpush.msra.mxu0 %v527
    %696 = vmatpush.msra.mxu0 %v520
    %697 = vmatpush.msra.mxu0 %v513
    %698 = vmatpush.msra.mxu0 %v506
    %699 = vmatpush.msra.mxu0 %v499
    %700 = vmatmul.f32.gmra.mxu0 %v495
    %v701 = vpop.f32.mrf.mxu0
    %v702 = vadd.f32 %v613, %v701
    %703 = vdwg.mxu0
    %704 = vmatpush.msra.mxu0 %v605
    %705 = vmatpush.msra.mxu0 %v598
    %706 = vmatpush.msra.mxu0 %v591
    %707 = vmatpush.msra.mxu0 %v584
    %708 = vmatpush.msra.mxu0 %v577
    %709 = vmatpush.msra.mxu0 %v570
    %710 = vmatpush.msra.mxu0 %v563
    %711 = vmatpush.msra.mxu0 %v556
    %712 = vmatpush.msra.mxu0 %v549
    %713 = vmatpush.msra.mxu0 %v542
    %714 = vmatpush.msra.mxu0 %v535
    %715 = vmatpush.msra.mxu0 %v528
    %716 = vmatpush.msra.mxu0 %v521
    %717 = vmatpush.msra.mxu0 %v514
    %718 = vmatpush.msra.mxu0 %v507
    %719 = vmatpush.msra.mxu0 %v500
    %720 = vmatmul.f32.gmra.mxu0 %v495
    %v721 = vpop.f32.mrf.mxu0
    %v722 = vadd.f32 %v614, %v721
    %723 = vdwg.mxu0
    %724 = vmatpush.msra.mxu0 %v606
    %725 = vmatpush.msra.mxu0 %v599
    %726 = vmatpush.msra.mxu0 %v592
    %727 = vmatpush.msra.mxu0 %v585
    %728 = vmatpush.msra.mxu0 %v578
    %729 = vmatpush.msra.mxu0 %v571
    %730 = vmatpush.msra.mxu0 %v564
    %731 = vmatpush.msra.mxu0 %v557
    %732 = vmatpush.msra.mxu0 %v550
    %733 = vmatpush.msra.mxu0 %v543
    %734 = vmatpush.msra.mxu0 %v536
    %735 = vmatpush.msra.mxu0 %v529
    %736 = vmatpush.msra.mxu0 %v522
    %737 = vmatpush.msra.mxu0 %v515
    %738 = vmatpush.msra.mxu0 %v508
    %739 = vmatpush.msra.mxu0 %v501
    %740 = vmatmul.f32.gmra.mxu0 %v495
    %v741 = vpop.f32.mrf.mxu0
    %v742 = vadd.f32 %v615, %v741
    %743 = vdwg.mxu0
    %744 = vmatpush.msra.mxu0 %v607
    %745 = vmatpush.msra.mxu0 %v600
    %746 = vmatpush.msra.mxu0 %v593
    %747 = vmatpush.msra.mxu0 %v586
    %748 = vmatpush.msra.mxu0 %v579
    %749 = vmatpush.msra.mxu0 %v572
    %750 = vmatpush.msra.mxu0 %v565
    %751 = vmatpush.msra.mxu0 %v558
    %752 = vmatpush.msra.mxu0 %v551
    %753 = vmatpush.msra.mxu0 %v544
    %754 = vmatpush.msra.mxu0 %v537
    %755 = vmatpush.msra.mxu0 %v530
    %756 = vmatpush.msra.mxu0 %v523
    %757 = vmatpush.msra.mxu0 %v516
    %758 = vmatpush.msra.mxu0 %v509
    %759 = vmatpush.msra.mxu0 %v502
    %760 = vmatmul.f32.gmra.mxu0 %v495
    %v761 = vpop.f32.mrf.mxu0
    %v762 = vadd.f32 %v616, %v761
    %763 = vdwg.mxu0
    %v764 = vmax.f32 %v642, 0.0
    %v765 = vmax.f32 %v662, 0.0
    %v766 = vmax.f32 %v682, 0.0
    %v767 = vmax.f32 %v702, 0.0
    %v768 = vmax.f32 %v722, 0.0
    %v769 = vmax.f32 %v742, 0.0
    %v770 = vmax.f32 %v762, 0.0
    %771 = vst [vmem:[#allocation16] sm:$0xff] %v764
    %772 = vst [vmem:[#allocation16 + $0x8] sm:$0xff] %v765
    %773 = vst [vmem:[#allocation16 + $0x10] sm:$0xff] %v766
    %774 = vst [vmem:[#allocation16 + $0x18] sm:$0xff] %v767
    %775 = vst [vmem:[#allocation16 + $0x20] sm:$0xff] %v768
    %776 = vst [vmem:[#allocation16 + $0x28] sm:$0xff] %v769
    %777 = vst [vmem:[#allocation16 + $0x30] sm:$0xff] %v770
    // Predicated region
    $region70: #{tpu_custom_call.1} parent=1 // pred_check
      _
    $region71: #{tpu_custom_call.1} parent=1 // pred_check_branch
      %779 = sbr.rel (0) target = $region73
    $region72: #{tpu_custom_call.1} parent=1 // pred_region
      %781 = vsyncadd [#allocation4], 0
      %s783 = sshll.u32 [#allocation16], 4
      %s784 = int_to_ptr.vmem [resolvable:$true] %s783
      %s785 = sshll.u32 %s9, 4
      %s786 = int_to_ptr.hbm [resolvable:$true] %s785
      %788 = dma.vmem_to_hbm [thread:$0]  %s784, 896, %s786, [#allocation4]
    $region73: #{tpu_custom_call.1} parent=1 // pred_fallthru
      _
    // Predicated region
    $region74: #{tpu_custom_call.1} parent=1 // pred_check
      _
    $region75: #{tpu_custom_call.1} parent=1 // pred_check_branch
      %790 = sbr.rel (0) target = $region77
    $region76: #{tpu_custom_call.1} parent=1 // pred_region
      %792 = dma.done [#allocation4], 896
    $region77: #{tpu_custom_call.1} parent=1 // pred_fallthru
      _
    %793 = vsyncpa [#allocation3], 1
    %794 = vsyncpa [#allocation6], 1
    %795 = vsyncpa [#allocation9], 1
    %796 = vsyncpa [#allocation12], 1
    %797 = vsyncpa [#allocation15], 1
    %798 = vsyncpa [#allocation4], 1

</llo_original>
